<compile_context>
chip_gen: v5e
topology: v5e:2x2
jax: 0.10.0
libtpu: 0.0.40
codegen_flags: <defaults>
</compile_context>

<pallas_src>
import jax
import jax.numpy as jnp
from jax.experimental import pallas as pl
from jax.experimental.pallas import tpu as pltpu

_LANE = 128
_SUBLANE = 8


def _round_up(n, m):
    return ((n + m - 1) // m) * m


def _sigmoid(z):
    # One EUP op (tanh) instead of exp + reciprocal; the 0.5*...+0.5 stays on
    # the VALU which has slack under the MXU.  Exact (no approx-recip error),
    # and no exp(-z) -> inf corner.
    return 0.5 * jnp.tanh(0.5 * z) + 0.5


def autoencoder_kernel(x_ref, wg_ref, bg_ref, wh_ref, bh_ref, o_ref):
    # x_ref:  (TB, Qp)  input tile (f32 or bf16, matches weight dtype)
    # wg_ref: (Qp, Kp)  g.weight pre-transposed to [in, out], zero-padded
    # bg_ref: (1,  Kp)  f32
    # wh_ref: (Kp, Qp)  h.weight pre-transposed to [in, out], zero-padded
    # bh_ref: (1,  Qp)  f32
    # o_ref:  (TB, Qp)
    wg = wg_ref[...]
    wh = wh_ref[...]

    # hidden = sigmoid(x @ Wg + b_g) -- plain NN matmul, f32 accumulate.
    z1 = jnp.dot(x_ref[...], wg, preferred_element_type=jnp.float32)
    hid = _sigmoid(z1 + bg_ref[...])

    # out = sigmoid(hidden @ Wh + b_h) -- hidden cast to the weight dtype so
    # the second matmul also runs at the fast MXU rate; accumulate stays f32.
    z2 = jnp.dot(hid.astype(wh.dtype), wh, preferred_element_type=jnp.float32)
    o_ref[...] = _sigmoid(z2 + bh_ref[...]).astype(o_ref.dtype)


def prepare_params(w_g, b_g, w_h, b_h, *, weights_dtype=jnp.float32):
    """One-time parameter preparation (call ONCE, outside the per-step path).

    * Pads the latent dim K AND the feature dim Q up to multiples of 128 so
      every operand / output is lane-dense.  Padding is inert: padded hidden
      units feed zero weight columns, and padded output columns are sliced
      away by the wrapper.
    * Pre-transposes both weights to [in, out] layout once, so the kernel
      runs NN matmuls with no per-step relayout of the resident weight.
    * Optionally casts weights to bf16 (2x MXU rate, half the weight bytes).
    """
    K, Q = w_g.shape
    assert w_h.shape == (Q, K) and b_g.shape == (K,) and b_h.shape == (Q,)
    Kp = _round_up(K, _LANE)
    Qp = _round_up(Q, _LANE)

    wg_t = jnp.zeros((Qp, Kp), weights_dtype).at[:Q, :K].set(
        w_g.T.astype(weights_dtype))
    bg = jnp.zeros((1, Kp), jnp.float32).at[0, :K].set(b_g.astype(jnp.float32))
    wh_t = jnp.zeros((Kp, Qp), weights_dtype).at[:K, :Q].set(
        w_h.T.astype(weights_dtype))
    bh = jnp.zeros((1, Qp), jnp.float32).at[0, :Q].set(b_h.astype(jnp.float32))
    # TODO(synk): optional int8 per-row-scaled weight path for v5e/v6e (native
    # int8 MXU); v7x would need an fp8 variant instead.
    return wg_t, bg, wh_t, bh


def _vmem_budget_bytes():
    # Generation-aware budget: ~3/4 of physical VMEM (~48 MiB on v7x's 64 MiB,
    # ~96 MiB on v5e/v6e's 128 MiB), leaving headroom for Mosaic internals.
    try:
        cap = int(pltpu.get_tpu_info().vmem_capacity_bytes)
    except Exception:  # not queryable: assume the smallest generation (v7x)
        cap = 64 * 1024 * 1024
    return (cap * 3) // 4


def _solve_batch_tiling(B, Qp, Kp, w_bytes, x_bytes, out_bytes, budget):
    """Pick (batch_tile, num_blocks) so the whole working set fits `budget`."""
    B8 = _round_up(max(B, 1), _SUBLANE)
    # Resident weights + biases (single-buffered via pl.Buffered(1)).
    weight_bytes = 2 * Qp * Kp * w_bytes + (Kp + Qp) * 4
    # Per-batch-row: double-buffered x / out tiles + in-kernel activations
    # (z1, hid, z2, sigmoid results), activations kept in f32.
    per_row = 2 * Qp * x_bytes + 2 * Qp * out_bytes + 2 * (Kp + Qp) * 4
    avail = max(budget - weight_bytes, per_row * _SUBLANE)
    bt_max = max((avail // per_row) // _SUBLANE * _SUBLANE, _SUBLANE)

    num_blocks = -(-B8 // bt_max)  # ceil
    if num_blocks == 1 and B8 >= 2 * _LANE:
        # Enough rows to give both v7x TensorCores >=128-row MXU tiles; costs
        # only one extra (~0.35 us) grid step on single-TC v5e/v6e.
        num_blocks = 2
    if num_blocks > 1 and num_blocks % 2:
        # Even block count so the "parallel" axis splits evenly across the two
        # v7x TensorCores (an odd count leaves a ~33% tail on one core).
        num_blocks += 1
    batch_tile = _round_up(-(-B8 // num_blocks), _SUBLANE)
    return batch_tile, num_blocks


def autoencoder_forward(x, wg_t, bg_p, wh_t, bh_p, *, batch_tile=None,
                        out_dtype=jnp.float32):
    """Forward pass. x: [B, Q]; (wg_t, bg_p, wh_t, bh_p) from prepare_params."""
    B, Q = x.shape
    Qp, Kp = wg_t.shape
    assert wh_t.shape == (Kp, Qp)
    assert bg_p.shape == (1, Kp) and bh_p.shape == (1, Qp)
    assert Q <= Qp

    w_dtype = wg_t.dtype
    # Stream x in the weight dtype: on the bf16 path this halves the dominant
    # x HBM bytes for large batches; the math inside stays f32.
    x_dtype = jnp.bfloat16 if w_dtype == jnp.bfloat16 else jnp.float32
    x_bytes = jnp.dtype(x_dtype).itemsize
    out_bytes = jnp.dtype(out_dtype).itemsize
    w_bytes = jnp.dtype(w_dtype).itemsize

    budget = _vmem_budget_bytes()
    if batch_tile is None:
        batch_tile, num_blocks = _solve_batch_tiling(
            B, Qp, Kp, w_bytes, x_bytes, out_bytes, budget)
    else:
        batch_tile = _round_up(batch_tile, _SUBLANE)
        num_blocks = -(-_round_up(B, _SUBLANE) // batch_tile)
    Bp = batch_tile * num_blocks

    x = x.astype(x_dtype)
    if (Bp, Qp) != (B, Q):
        x = jnp.pad(x, ((0, Bp - B), (0, Qp - Q)))

    # Weights/biases have a constant index_map -> single pipeline buffer; the
    # default second buffer would be dead VMEM (matters on v7x's 64 MiB).
    resident = dict(pipeline_mode=pl.Buffered(1))

    out = pl.pallas_call(
        autoencoder_kernel,
        out_shape=jax.ShapeDtypeStruct((Bp, Qp), out_dtype),
        grid_spec=pltpu.PrefetchScalarGridSpec(
            num_scalar_prefetch=0,
            grid=(num_blocks,),
            in_specs=[
                pl.BlockSpec((batch_tile, Qp), lambda i: (i, 0)),   # x tile
                pl.BlockSpec((Qp, Kp), lambda i: (0, 0), **resident),  # Wg^T
                pl.BlockSpec((1, Kp), lambda i: (0, 0), **resident),   # b_g
                pl.BlockSpec((Kp, Qp), lambda i: (0, 0), **resident),  # Wh^T
                pl.BlockSpec((1, Qp), lambda i: (0, 0), **resident),   # b_h
            ],
            out_specs=pl.BlockSpec((batch_tile, Qp), lambda i: (i, 0)),
        ),
        compiler_params=pltpu.CompilerParams(
            dimension_semantics=("parallel",),
            vmem_limit_bytes=int(budget),
        ),
    )(x, wg_t, bg_p, wh_t, bh_p)

    return out[:B, :Q]


def _init_params(key, num_question, k):
    """Deterministic init mirroring nn.Linear default (uniform +/- 1/sqrt(fan_in))."""
    kg_w, kg_b, kh_w, kh_b = jax.random.split(key, 4)
    bound_g = 1.0 / jnp.sqrt(num_question)
    bound_h = 1.0 / jnp.sqrt(k)
    w_g = jax.random.uniform(kg_w, (k, num_question), jnp.float32, -bound_g, bound_g)
    b_g = jax.random.uniform(kg_b, (k,), jnp.float32, -bound_g, bound_g)
    w_h = jax.random.uniform(kh_w, (num_question, k), jnp.float32, -bound_h, bound_h)
    b_h = jax.random.uniform(kh_b, (num_question,), jnp.float32, -bound_h, bound_h)
    return w_g, b_g, w_h, b_h


if __name__ == "__main__":
    key = jax.random.PRNGKey(0)
    B = 250   # batch of user vectors (exercises batch padding + even 2-block grid)
    Q = 120   # num_question (NOT a multiple of 128 -> exercises Q lane padding)
    K = 100   # latent k (PyTorch default)           -> padded to 128 once

    k_x, k_p = jax.random.split(key)
    x = jax.random.uniform(k_x, (B, Q), jnp.float32)      # user vectors in [0, 1)
    w_g, b_g, w_h, b_h = _init_params(k_p, Q, K)

    # Pure-JAX reference of the PyTorch forward-pass semantics.
    ref = jax.nn.sigmoid(jax.nn.sigmoid(x @ w_g.T + b_g) @ w_h.T + b_h)

    # f32 weight path (exact tanh-based sigmoid; only MXU rounding remains).
    params_f32 = prepare_params(w_g, b_g, w_h, b_h)            # one-time prep
    out = jax.block_until_ready(autoencoder_forward(x, *params_f32))
    assert out.shape == (B, Q) and out.dtype == jnp.float32
    assert jnp.allclose(out, ref, atol=2e-3, rtol=2e-3)

    # bf16 path: bf16 weights AND bf16-streamed x/hidden into the MXU
    # (accumulate/bias/sigmoid stay f32) -> looser tolerance.
    params_bf16 = prepare_params(w_g, b_g, w_h, b_h, weights_dtype=jnp.bfloat16)
    out_bf16 = jax.block_until_ready(autoencoder_forward(x, *params_bf16))
    assert out_bf16.shape == (B, Q) and out_bf16.dtype == jnp.float32
    assert jnp.allclose(out_bf16, ref, atol=5e-2, rtol=5e-2)

    print("KERNEL_OK")
</pallas_src>

<mosaic_0001>
module attributes {stable_mosaic.version = 11 : i64} {
  func.func @autoencoder_kernel(%arg0: i32, %arg1: memref<128x128xf32, #tpu.memory_space<vmem>>, %arg2: memref<128x128xf32, #tpu.memory_space<vmem>>, %arg3: memref<1x128xf32, #tpu.memory_space<vmem>>, %arg4: memref<128x128xf32, #tpu.memory_space<vmem>>, %arg5: memref<1x128xf32, #tpu.memory_space<vmem>>, %arg6: memref<128x128xf32, #tpu.memory_space<vmem>>) attributes {dimension_semantics = [#tpu.dimension_semantics<parallel>], iteration_bounds = array<i64: 2>, scalar_prefetch = 0 : i64, scratch_operands = 0 : i64, tpu.core_type = #tpu.core_type<tc>, window_params = [{transform_indices = @transform_0, window_bounds = array<i64: 128, 128>}, {pipeline_mode = #tpu.pipeline_mode<synchronous>, transform_indices = @transform_1, window_bounds = array<i64: 128, 128>}, {pipeline_mode = #tpu.pipeline_mode<synchronous>, transform_indices = @transform_2, window_bounds = array<i64: 1, 128>}, {pipeline_mode = #tpu.pipeline_mode<synchronous>, transform_indices = @transform_3, window_bounds = array<i64: 128, 128>}, {pipeline_mode = #tpu.pipeline_mode<synchronous>, transform_indices = @transform_4, window_bounds = array<i64: 1, 128>}, {transform_indices = @transform_5, window_bounds = array<i64: 128, 128>}]} {
    %c0 = arith.constant 0 : index
    %c0_0 = arith.constant 0 : index
    %0 = vector.load %arg2[%c0, %c0_0] : memref<128x128xf32, #tpu.memory_space<vmem>>, vector<128x128xf32>
    %c0_1 = arith.constant 0 : index
    %c0_2 = arith.constant 0 : index
    %1 = vector.load %arg4[%c0_1, %c0_2] : memref<128x128xf32, #tpu.memory_space<vmem>>, vector<128x128xf32>
    %c0_3 = arith.constant 0 : index
    %c0_4 = arith.constant 0 : index
    %2 = vector.load %arg1[%c0_3, %c0_4] : memref<128x128xf32, #tpu.memory_space<vmem>>, vector<128x128xf32>
    %cst = arith.constant dense<0.000000e+00> : vector<128x128xf32>
    %3 = tpu.matmul %2, %0, %cst {dimension_numbers = #tpu.dot_dimension_numbers<[1], [0], [0], [1], [0, 0, 1, 1], [], []>} : vector<128x128xf32>, vector<128x128xf32>, vector<128x128xf32> -> vector<128x128xf32>
    %c0_5 = arith.constant 0 : index
    %c0_6 = arith.constant 0 : index
    %4 = vector.load %arg3[%c0_5, %c0_6] : memref<1x128xf32, #tpu.memory_space<vmem>>, vector<1x128xf32>
    %5 = vector.broadcast %4 : vector<1x128xf32> to vector<128x128xf32>
    %6 = arith.addf %3, %5 : vector<128x128xf32>
    %cst_7 = arith.constant 5.000000e-01 : f32
    %7 = vector.broadcast %cst_7 : f32 to vector<128x128xf32>
    %8 = arith.mulf %7, %6 : vector<128x128xf32>
    %9 = math.tanh %8 : vector<128x128xf32>
    %cst_8 = arith.constant 5.000000e-01 : f32
    %10 = vector.broadcast %cst_8 : f32 to vector<128x128xf32>
    %11 = arith.mulf %10, %9 : vector<128x128xf32>
    %cst_9 = arith.constant 5.000000e-01 : f32
    %12 = vector.broadcast %cst_9 : f32 to vector<128x128xf32>
    %13 = arith.addf %11, %12 : vector<128x128xf32>
    %cst_10 = arith.constant dense<0.000000e+00> : vector<128x128xf32>
    %14 = tpu.matmul %13, %1, %cst_10 {dimension_numbers = #tpu.dot_dimension_numbers<[1], [0], [0], [1], [0, 0, 1, 1], [], []>} : vector<128x128xf32>, vector<128x128xf32>, vector<128x128xf32> -> vector<128x128xf32>
    %c0_11 = arith.constant 0 : index
    %c0_12 = arith.constant 0 : index
    %15 = vector.load %arg5[%c0_11, %c0_12] : memref<1x128xf32, #tpu.memory_space<vmem>>, vector<1x128xf32>
    %16 = vector.broadcast %15 : vector<1x128xf32> to vector<128x128xf32>
    %17 = arith.addf %14, %16 : vector<128x128xf32>
    %cst_13 = arith.constant 5.000000e-01 : f32
    %18 = vector.broadcast %cst_13 : f32 to vector<128x128xf32>
    %19 = arith.mulf %18, %17 : vector<128x128xf32>
    %20 = math.tanh %19 : vector<128x128xf32>
    %cst_14 = arith.constant 5.000000e-01 : f32
    %21 = vector.broadcast %cst_14 : f32 to vector<128x128xf32>
    %22 = arith.mulf %21, %20 : vector<128x128xf32>
    %cst_15 = arith.constant 5.000000e-01 : f32
    %23 = vector.broadcast %cst_15 : f32 to vector<128x128xf32>
    %24 = arith.addf %22, %23 : vector<128x128xf32>
    %c0_16 = arith.constant 0 : index
    %c0_17 = arith.constant 0 : index
    %25 = vector.load %arg6[%c0_16, %c0_17] : memref<128x128xf32, #tpu.memory_space<vmem>>, vector<128x128xf32>
    tpu.vector_store %arg6[%c0_16, %c0_17], %24 {strides = array<i32>} : memref<128x128xf32, #tpu.memory_space<vmem>>, vector<128x128xf32>,
    return
  }
  func.func @transform_0(%arg0: i32) -> (i32, i32) {
    %c0_i32 = arith.constant 0 : i32
    %c0_i32_0 = arith.constant 0 : i32
    return %arg0, %c0_i32 : i32, i32
  }
  func.func @transform_1(%arg0: i32) -> (i32, i32) {
    %c0_i32 = arith.constant 0 : i32
    %c0_i32_0 = arith.constant 0 : i32
    %c0_i32_1 = arith.constant 0 : i32
    return %c0_i32, %c0_i32_0 : i32, i32
  }
  func.func @transform_2(%arg0: i32) -> (i32, i32) {
    %c0_i32 = arith.constant 0 : i32
    %c0_i32_0 = arith.constant 0 : i32
    %c0_i32_1 = arith.constant 0 : i32
    return %c0_i32, %c0_i32_0 : i32, i32
  }
  func.func @transform_3(%arg0: i32) -> (i32, i32) {
    %c0_i32 = arith.constant 0 : i32
    %c0_i32_0 = arith.constant 0 : i32
    %c0_i32_1 = arith.constant 0 : i32
    return %c0_i32, %c0_i32_0 : i32, i32
  }
  func.func @transform_4(%arg0: i32) -> (i32, i32) {
    %c0_i32 = arith.constant 0 : i32
    %c0_i32_0 = arith.constant 0 : i32
    %c0_i32_1 = arith.constant 0 : i32
    return %c0_i32, %c0_i32_0 : i32, i32
  }
  func.func @transform_5(%arg0: i32) -> (i32, i32) {
    %c0_i32 = arith.constant 0 : i32
    %c0_i32_0 = arith.constant 0 : i32
    return %arg0, %c0_i32 : i32, i32
  }
}

</mosaic_0001>

<llo_original>
// kernel: tpu_custom_call.1
$region0: #{tpu_custom_call.1}
  #allocation0 [shape = 'u32[]', space=smem, size = 0x4, offset = 0x4, fixed_abs, tag = 'smem constant byte address 0x4 - core index']
  #allocation1 [shape = 'u32[72,128]{1,0:T(1,128)}', space=vmem, size = 0x9000, scoped, tag = 'internal scratch']
  %s0 = inlined_call_operand.hbm [shape: f32[256,128], index: 0, kind: input, shape index: {}]
  %s1 = inlined_call_operand.hbm [shape: f32[128,128], index: 1, kind: input, shape index: {}]
  %s2 = inlined_call_operand.vmem [shape: f32[1,128], index: 2, kind: input, shape index: {}]
  %s3 = inlined_call_operand.hbm [shape: f32[128,128], index: 3, kind: input, shape index: {}]
  %s4 = inlined_call_operand.vmem [shape: f32[1,128], index: 4, kind: input, shape index: {}]
  %s5 = inlined_call_operand.hbm [shape: f32[256,128], index: 5, kind: output, shape index: {}]
  %s6 = sld [smem:[#allocation0]]
  $region65: #{tpu_custom_call.1} parent=0
    _
  %s8 = ssub.s32 1, %s6
  %s9 = scalar_select 0, %s8, %s6
  $region1: #{tpu_custom_call.1} parent=0
    #allocation2 [shape = 'u8[131072]{0}', space=vmem, size = 0x20000, scoped, tag = 'input window, operand 0']
    #allocation3 [shape = 's32[2]{0}', space=sflag, size = 0x8, scoped, tag = 'scoped memory for tpu_custom_call.1']
    #allocation4 [shape = 's32[2]{0}', space=sflag, size = 0x8, scoped, tag = 'scoped memory for tpu_custom_call.1']
    #allocation5 [shape = 'u8[65536]{0}', space=vmem, size = 0x10000, scoped, tag = 'input window, operand 1, single buffered']
    #allocation6 [shape = 's32[1]{0}', space=sflag, size = 0x4, scoped, tag = 'scoped memory for tpu_custom_call.1']
    #allocation7 [shape = 'u8[65536]{0}', space=vmem, size = 0x10000, scoped, tag = 'input window, operand 3, single buffered']
    #allocation8 [shape = 'u8[131072]{0}', space=vmem, size = 0x20000, scoped, tag = 'output window, operand 0']
    %10 = vsyncpa [#allocation3], 0
    %s11 = scalar_lea.sflag [#allocation3], 1
    %12 = vsyncpa %s11, 0
    %13 = vsyncpa [#allocation6], 0
    %14 = vsyncpa [#allocation4], 0
    %s15 = scalar_lea.sflag [#allocation4], 1
    %16 = vsyncpa %s15, 0
    loop: start=0, step=1, limit=4
    $region2: #{tpu_custom_call.1} parent=1 // loop_pre_header
      _
    $region3: #{tpu_custom_call.1} parent=1 // loop_header
      %s18 = sphi 0, %s22
      %p19 = scmp.ge.s32.totalorder %s18, 4
      %s28 = sphi 0, %s30
      %s31 = sphi 0, %s28
      %s32 = sphi 0, %s31
      %s48 = sphi 0, %s32
      %s52 = sphi 0, %s52
      %s54 = sphi 0, %s52
      %s55 = sphi 0, %s54
      %s69 = sphi 0, %s55
      %s73 = sphi 0, %s73
      %s75 = sphi 0, %s73
      %s76 = sphi 0, %s75
      %s90 = sphi 0, %s76
      %s94 = sphi 0, %s94
      %s96 = sphi 0, %s94
      %s97 = sphi 0, %s96
      %s111 = sphi 0, %s97
      %s115 = sphi 0, %s115
      %s117 = sphi 0, %s115
      %s118 = sphi 0, %s117
      %s132 = sphi 0, %s118
      %s138 = sphi 0, %s140
      %s141 = sphi 0, %s138
      %s142 = sphi 0, %s141
      %s158 = sphi 0, %s142
    $region4: #{tpu_custom_call.1} parent=1 // loop_header_branch
      %21 = sbr.rel (%p19) target = $region8
    $region5: #{tpu_custom_call.1} parent=1 // loop_body
      %s23 = ssub.s32 %s18, 1
      %s24 = ssub.s32 %s18, 2
      %s25 = sadd.s32 %s18, 1
      %s26 = ssub.s32 %s18, %s25
      %p27 = scmp.eq.s32.totalorder %s26, 0
      %s29 = sadd.s32 %s28, 1
      %s30 = scalar_select %p27, %s28, %s29
      %p33 = pneg %p27
      %p34 = scmp.eq.s32.totalorder %s18, 1
      %p35 = por %p33, %p34
      %p36 = scmp.ne.s32.totalorder %s28, %s31
      %p37 = scmp.eq.s32.totalorder %s18, 0
      %p38 = por %p36, %p37
      %p39 = scmp.ne.s32.totalorder %s28, %s31
      %p40 = scmp.eq.s32.totalorder %s23, 1
      %p41 = por %p39, %p40
      %p42 = scmp.ne.s32.totalorder %s31, %s32
      %p43 = scmp.eq.s32.totalorder %s23, 0
      %p44 = por %p42, %p43
      %p45 = scmp.ne.s32.totalorder %s31, %s32
      %p46 = scmp.eq.s32.totalorder %s24, 1
      %p47 = por %p45, %p46
      %p49 = scmp.ne.s32.totalorder %s32, %s48
      %p50 = scmp.eq.s32.totalorder %s24, 0
      %p51 = por %p49, %p50
      %s53 = sadd.s32 %s52, 1
      %p56 = scmp.eq.s32.totalorder %s18, 1
      %p57 = scmp.ne.s32.totalorder %s52, %s54
      %p58 = scmp.eq.s32.totalorder %s18, 0
      %p59 = por %p57, %p58
      %p60 = scmp.ne.s32.totalorder %s52, %s54
      %p61 = scmp.eq.s32.totalorder %s23, 1
      %p62 = por %p60, %p61
      %p63 = scmp.ne.s32.totalorder %s54, %s55
      %p64 = scmp.eq.s32.totalorder %s23, 0
      %p65 = por %p63, %p64
      %p66 = scmp.ne.s32.totalorder %s54, %s55
      %p67 = scmp.eq.s32.totalorder %s24, 1
      %p68 = por %p66, %p67
      %p70 = scmp.ne.s32.totalorder %s55, %s69
      %p71 = scmp.eq.s32.totalorder %s24, 0
      %p72 = por %p70, %p71
      %s74 = sadd.s32 %s73, 1
      %p77 = scmp.eq.s32.totalorder %s18, 1
      %p78 = scmp.ne.s32.totalorder %s73, %s75
      %p79 = scmp.eq.s32.totalorder %s18, 0
      %p80 = por %p78, %p79
      %p81 = scmp.ne.s32.totalorder %s73, %s75
      %p82 = scmp.eq.s32.totalorder %s23, 1
      %p83 = por %p81, %p82
      %p84 = scmp.ne.s32.totalorder %s75, %s76
      %p85 = scmp.eq.s32.totalorder %s23, 0
      %p86 = por %p84, %p85
      %p87 = scmp.ne.s32.totalorder %s75, %s76
      %p88 = scmp.eq.s32.totalorder %s24, 1
      %p89 = por %p87, %p88
      %p91 = scmp.ne.s32.totalorder %s76, %s90
      %p92 = scmp.eq.s32.totalorder %s24, 0
      %p93 = por %p91, %p92
      %s95 = sadd.s32 %s94, 1
      %p98 = scmp.eq.s32.totalorder %s18, 1
      %p99 = scmp.ne.s32.totalorder %s94, %s96
      %p100 = scmp.eq.s32.totalorder %s18, 0
      %p101 = por %p99, %p100
      %p102 = scmp.ne.s32.totalorder %s94, %s96
      %p103 = scmp.eq.s32.totalorder %s23, 1
      %p104 = por %p102, %p103
      %p105 = scmp.ne.s32.totalorder %s96, %s97
      %p106 = scmp.eq.s32.totalorder %s23, 0
      %p107 = por %p105, %p106
      %p108 = scmp.ne.s32.totalorder %s96, %s97
      %p109 = scmp.eq.s32.totalorder %s24, 1
      %p110 = por %p108, %p109
      %p112 = scmp.ne.s32.totalorder %s97, %s111
      %p113 = scmp.eq.s32.totalorder %s24, 0
      %p114 = por %p112, %p113
      %s116 = sadd.s32 %s115, 1
      %p119 = scmp.eq.s32.totalorder %s18, 1
      %p120 = scmp.ne.s32.totalorder %s115, %s117
      %p121 = scmp.eq.s32.totalorder %s18, 0
      %p122 = por %p120, %p121
      %p123 = scmp.ne.s32.totalorder %s115, %s117
      %p124 = scmp.eq.s32.totalorder %s23, 1
      %p125 = por %p123, %p124
      %p126 = scmp.ne.s32.totalorder %s117, %s118
      %p127 = scmp.eq.s32.totalorder %s23, 0
      %p128 = por %p126, %p127
      %p129 = scmp.ne.s32.totalorder %s117, %s118
      %p130 = scmp.eq.s32.totalorder %s24, 1
      %p131 = por %p129, %p130
      %p133 = scmp.ne.s32.totalorder %s118, %s132
      %p134 = scmp.eq.s32.totalorder %s24, 0
      %p135 = por %p133, %p134
      %s136 = ssub.s32 %s18, %s25
      %p137 = scmp.eq.s32.totalorder %s136, 0
      %s139 = sadd.s32 %s138, 1
      %s140 = scalar_select %p137, %s138, %s139
      %p143 = pneg %p137
      %p144 = scmp.eq.s32.totalorder %s18, 1
      %p145 = por %p143, %p144
      %p146 = scmp.ne.s32.totalorder %s138, %s141
      %p147 = scmp.eq.s32.totalorder %s18, 0
      %p148 = por %p146, %p147
      %p149 = scmp.ne.s32.totalorder %s138, %s141
      %p150 = scmp.eq.s32.totalorder %s23, 1
      %p151 = por %p149, %p150
      %p152 = scmp.ne.s32.totalorder %s141, %s142
      %p153 = scmp.eq.s32.totalorder %s23, 0
      %p154 = por %p152, %p153
      %p155 = scmp.ne.s32.totalorder %s141, %s142
      %p156 = scmp.eq.s32.totalorder %s24, 1
      %p157 = por %p155, %p156
      %p159 = scmp.ne.s32.totalorder %s142, %s158
      %p160 = scmp.eq.s32.totalorder %s24, 0
      %p161 = por %p159, %p160
      %p162 = scmp.le.s32.totalorder 1, %s18
      %p163 = scmp.lt.s32.totalorder %s18, 3
      %p164 = pnand %p162, %p163
      %p165 = pneg %p164
      // Predicated region
      $region9: #{tpu_custom_call.1} parent=5 // pred_check
        _
      $region10: #{tpu_custom_call.1} parent=5 // pred_check_branch
        %167 = sbr.rel (%p164) target = $region12
      $region11: #{tpu_custom_call.1} parent=5 // pred_region
        %s168 = ssub.s32 %s18, 1
        // Predicated region
        $region13: #{tpu_custom_call.1} parent=11 // pred_check
          %p169 = pneg %p65
        $region14: #{tpu_custom_call.1} parent=11 // pred_check_branch
          %171 = sbr.rel (%p169) target = $region16
        $region15: #{tpu_custom_call.1} parent=11 // pred_region
          %173 = vsyncadd [#allocation6], 0
          %s174 = sshll.u32 %s1, 4
          %s175 = int_to_ptr.hbm [resolvable:$true] %s174
          %s176 = sshll.u32 [#allocation5], 4
          %s177 = int_to_ptr.vmem [resolvable:$true] %s176
          %182 = dma.hbm_to_vmem [thread:$0]  %s175, 2048, %s177, [#allocation6], 128, 128, 8
        $region16: #{tpu_custom_call.1} parent=11 // pred_fallthru
          _
        // Predicated region
        $region17: #{tpu_custom_call.1} parent=11 // pred_check
          %p183 = pneg %p86
        $region18: #{tpu_custom_call.1} parent=11 // pred_check_branch
          %185 = sbr.rel (%p183) target = $region20
        $region19: #{tpu_custom_call.1} parent=11 // pred_region
          _
        $region20: #{tpu_custom_call.1} parent=11 // pred_fallthru
          _
        // Predicated region
        $region21: #{tpu_custom_call.1} parent=11 // pred_check
          %p186 = pneg %p107
        $region22: #{tpu_custom_call.1} parent=11 // pred_check_branch
          %188 = sbr.rel (%p186) target = $region24
        $region23: #{tpu_custom_call.1} parent=11 // pred_region
          %190 = vsyncadd [#allocation6], 0
          %s191 = sshll.u32 %s3, 4
          %s192 = int_to_ptr.hbm [resolvable:$true] %s191
          %s193 = sshll.u32 [#allocation7], 4
          %s194 = int_to_ptr.vmem [resolvable:$true] %s193
          %199 = dma.hbm_to_vmem [thread:$0]  %s192, 2048, %s194, [#allocation6], 128, 128, 8
        $region24: #{tpu_custom_call.1} parent=11 // pred_fallthru
          _
        // Predicated region
        $region25: #{tpu_custom_call.1} parent=11 // pred_check
          %p200 = pneg %p128
        $region26: #{tpu_custom_call.1} parent=11 // pred_check_branch
          %202 = sbr.rel (%p200) target = $region28
        $region27: #{tpu_custom_call.1} parent=11 // pred_region
          _
        $region28: #{tpu_custom_call.1} parent=11 // pred_fallthru
          _
      $region12: #{tpu_custom_call.1} parent=5 // pred_fallthru
        _
      %p203 = scmp.lt.s32.totalorder %s18, 2
      // Predicated region
      $region29: #{tpu_custom_call.1} parent=5 // pred_check
        %p204 = pneg %p203
      $region30: #{tpu_custom_call.1} parent=5 // pred_check_branch
        %206 = sbr.rel (%p204) target = $region32
      $region31: #{tpu_custom_call.1} parent=5 // pred_region
        // Predicated region
        $region33: #{tpu_custom_call.1} parent=31 // pred_check
          %p207 = pneg %p38
        $region34: #{tpu_custom_call.1} parent=31 // pred_check_branch
          %209 = sbr.rel (%p207) target = $region36
        $region35: #{tpu_custom_call.1} parent=31 // pred_region
          %s210 = sand.u32 %s28, 1
          %s211 = scalar_lea.sflag [#allocation3], %s210
          %s212 = sand.u32 %s28, 1
          %s213 = smul.addr %s212, 128
          %s214 = scalar_lea.vmem [#allocation2], %s213
          %s215 = smul.u32 16, %s18
          %217 = vsyncadd %s211, 0
          %s218 = smul.addr %s215, 8
          %s219 = scalar_lea.hbm %s0, %s218
          %s220 = sshll.u32 %s219, 4
          %s221 = int_to_ptr.hbm [resolvable:$true] %s220
          %s222 = sshll.u32 %s214, 4
          %s223 = int_to_ptr.vmem [resolvable:$true] %s222
          %228 = dma.hbm_to_vmem [thread:$0]  %s221, 2048, %s223, %s211, 128, 128, 8
        $region36: #{tpu_custom_call.1} parent=31 // pred_fallthru
          _
      $region32: #{tpu_custom_call.1} parent=5 // pred_fallthru
        _
      %p229 = scmp.le.s32.totalorder 1, %s18
      %p230 = scmp.lt.s32.totalorder %s18, 3
      %p231 = pnand %p229, %p230
      %p232 = pneg %p231
      // Predicated region
      $region37: #{tpu_custom_call.1} parent=5 // pred_check
        _
      $region38: #{tpu_custom_call.1} parent=5 // pred_check_branch
        %234 = sbr.rel (%p231) target = $region40
      $region39: #{tpu_custom_call.1} parent=5 // pred_region
        %s235 = ssub.s32 %s18, 1
        %s236 = sand.u32 %s31, 1
        %s237 = scalar_lea.sflag [#allocation3], %s236
        %s238 = sand.u32 %s31, 1
        %s239 = smul.addr %s238, 128
        %s240 = scalar_lea.vmem [#allocation2], %s239
        // Predicated region
        $region41: #{tpu_custom_call.1} parent=39 // pred_check
          %p241 = pneg %p44
        $region42: #{tpu_custom_call.1} parent=39 // pred_check_branch
          %243 = sbr.rel (%p241) target = $region44
        $region43: #{tpu_custom_call.1} parent=39 // pred_region
          %245 = dma.done %s237, 2048
        $region44: #{tpu_custom_call.1} parent=39 // pred_fallthru
          _
        // Predicated region
        $region45: #{tpu_custom_call.1} parent=39 // pred_check
          %p246 = pneg %p65
        $region46: #{tpu_custom_call.1} parent=39 // pred_check_branch
          %248 = sbr.rel (%p246) target = $region48
        $region47: #{tpu_custom_call.1} parent=39 // pred_region
          %250 = dma.done [#allocation6], 2048
        $region48: #{tpu_custom_call.1} parent=39 // pred_fallthru
          _
        // Predicated region
        $region49: #{tpu_custom_call.1} parent=39 // pred_check
          %p251 = pneg %p107
        $region50: #{tpu_custom_call.1} parent=39 // pred_check_branch
          %253 = sbr.rel (%p251) target = $region52
        $region51: #{tpu_custom_call.1} parent=39 // pred_region
          %255 = dma.done [#allocation6], 2048
        $region52: #{tpu_custom_call.1} parent=39 // pred_fallthru
          _
        %s256 = sand.u32 %s31, 1
        %s257 = scalar_lea.sflag [#allocation3], %s256
        %s258 = sand.u32 %s31, 1
        %s259 = smul.addr %s258, 128
        %s260 = scalar_lea.vmem [#allocation2], %s259
        %p261 = pneg %p44
        %p262 = pneg %p41
        %p263 = pneg %p65
        %p264 = pneg %p62
        %p265 = pneg %p86
        %p266 = pneg %p83
        %p267 = pneg %p107
        %p268 = pneg %p104
        %p269 = pneg %p128
        %p270 = pneg %p125
        %p271 = pneg %p154
        %p272 = pneg %p151
        %s273 = sand.u32 %s141, 1
        %s274 = scalar_lea.sflag [#allocation4], %s273
        %s275 = sand.u32 %s141, 1
        %s276 = smul.addr %s275, 128
        %s277 = scalar_lea.vmem [#allocation8], %s276
        %s278 = smul.u32 16, %s23
        %s279 = smul.u32 16, %s23
        %v280 = vld [vmem:[#allocation5] sm:$0xff]
        %v281 = vld [vmem:[#allocation5 + $0x8] sm:$0xff]
        %v282 = vld [vmem:[#allocation5 + $0x10] sm:$0xff]
        %v283 = vld [vmem:[#allocation5 + $0x18] sm:$0xff]
        %v284 = vld [vmem:[#allocation5 + $0x20] sm:$0xff]
        %v285 = vld [vmem:[#allocation5 + $0x28] sm:$0xff]
        %v286 = vld [vmem:[#allocation5 + $0x30] sm:$0xff]
        %v287 = vld [vmem:[#allocation5 + $0x38] sm:$0xff]
        %v288 = vld [vmem:[#allocation5 + $0x40] sm:$0xff]
        %v289 = vld [vmem:[#allocation5 + $0x48] sm:$0xff]
        %v290 = vld [vmem:[#allocation5 + $0x50] sm:$0xff]
        %v291 = vld [vmem:[#allocation5 + $0x58] sm:$0xff]
        %v292 = vld [vmem:[#allocation5 + $0x60] sm:$0xff]
        %v293 = vld [vmem:[#allocation5 + $0x68] sm:$0xff]
        %v294 = vld [vmem:[#allocation5 + $0x70] sm:$0xff]
        %v295 = vld [vmem:[#allocation5 + $0x78] sm:$0xff]
        %v296 = vld [vmem:[#allocation7] sm:$0xff]
        %v297 = vld [vmem:[#allocation7 + $0x8] sm:$0xff]
        %v298 = vld [vmem:[#allocation7 + $0x10] sm:$0xff]
        %v299 = vld [vmem:[#allocation7 + $0x18] sm:$0xff]
        %v300 = vld [vmem:[#allocation7 + $0x20] sm:$0xff]
        %v301 = vld [vmem:[#allocation7 + $0x28] sm:$0xff]
        %v302 = vld [vmem:[#allocation7 + $0x30] sm:$0xff]
        %v303 = vld [vmem:[#allocation7 + $0x38] sm:$0xff]
        %v304 = vld [vmem:[#allocation7 + $0x40] sm:$0xff]
        %v305 = vld [vmem:[#allocation7 + $0x48] sm:$0xff]
        %v306 = vld [vmem:[#allocation7 + $0x50] sm:$0xff]
        %v307 = vld [vmem:[#allocation7 + $0x58] sm:$0xff]
        %v308 = vld [vmem:[#allocation7 + $0x60] sm:$0xff]
        %v309 = vld [vmem:[#allocation7 + $0x68] sm:$0xff]
        %v310 = vld [vmem:[#allocation7 + $0x70] sm:$0xff]
        %v311 = vld [vmem:[#allocation7 + $0x78] sm:$0xff]
        %v312 = vld [vmem:[%s240] sm:$0xff]
        %v313 = vld [vmem:[%s240 + $0x8] sm:$0xff]
        %v314 = vld [vmem:[%s240 + $0x10] sm:$0xff]
        %v315 = vld [vmem:[%s240 + $0x18] sm:$0xff]
        %v316 = vld [vmem:[%s240 + $0x20] sm:$0xff]
        %v317 = vld [vmem:[%s240 + $0x28] sm:$0xff]
        %v318 = vld [vmem:[%s240 + $0x30] sm:$0xff]
        %v319 = vld [vmem:[%s240 + $0x38] sm:$0xff]
        %v320 = vld [vmem:[%s240 + $0x40] sm:$0xff]
        %v321 = vld [vmem:[%s240 + $0x48] sm:$0xff]
        %v322 = vld [vmem:[%s240 + $0x50] sm:$0xff]
        %v323 = vld [vmem:[%s240 + $0x58] sm:$0xff]
        %v324 = vld [vmem:[%s240 + $0x60] sm:$0xff]
        %v325 = vld [vmem:[%s240 + $0x68] sm:$0xff]
        %v326 = vld [vmem:[%s240 + $0x70] sm:$0xff]
        %v327 = vld [vmem:[%s240 + $0x78] sm:$0xff]
        %v328 = vld [vmem:[%s2] sm:$0x1]
        %v330 = vperm.slane %v328, 0
        %332 = vmatpush.msra.mxu0 %v295
        %333 = vmatpush.msra.mxu0 %v294
        %334 = vmatpush.msra.mxu0 %v293
        %335 = vmatpush.msra.mxu0 %v292
        %336 = vmatpush.msra.mxu0 %v291
        %337 = vmatpush.msra.mxu0 %v290
        %338 = vmatpush.msra.mxu0 %v289
        %339 = vmatpush.msra.mxu0 %v288
        %340 = vmatpush.msra.mxu0 %v287
        %341 = vmatpush.msra.mxu0 %v286
        %342 = vmatpush.msra.mxu0 %v285
        %343 = vmatpush.msra.mxu0 %v284
        %344 = vmatpush.msra.mxu0 %v283
        %345 = vmatpush.msra.mxu0 %v282
        %346 = vmatpush.msra.mxu0 %v281
        %347 = vmatpush.msra.mxu0 %v280
        %348 = vmatmul.f32.gmra.mxu0 %v312
        %v349 = vpop.f32.mrf.mxu0
        %v350 = vadd.f32 %v330, %v349
        %351 = vmatmul.f32.gmra.mxu0 %v313
        %v352 = vpop.f32.mrf.mxu0
        %v353 = vadd.f32 %v330, %v352
        %354 = vmatmul.f32.gmra.mxu0 %v314
        %v355 = vpop.f32.mrf.mxu0
        %v356 = vadd.f32 %v330, %v355
        %357 = vmatmul.f32.gmra.mxu0 %v315
        %v358 = vpop.f32.mrf.mxu0
        %v359 = vadd.f32 %v330, %v358
        %360 = vmatmul.f32.gmra.mxu0 %v316
        %v361 = vpop.f32.mrf.mxu0
        %v362 = vadd.f32 %v330, %v361
        %363 = vmatmul.f32.gmra.mxu0 %v317
        %v364 = vpop.f32.mrf.mxu0
        %v365 = vadd.f32 %v330, %v364
        %366 = vmatmul.f32.gmra.mxu0 %v318
        %v367 = vpop.f32.mrf.mxu0
        %v368 = vadd.f32 %v330, %v367
        %369 = vmatmul.f32.gmra.mxu0 %v319
        %v370 = vpop.f32.mrf.mxu0
        %v371 = vadd.f32 %v330, %v370
        %372 = vmatmul.f32.gmra.mxu0 %v320
        %v373 = vpop.f32.mrf.mxu0
        %v374 = vadd.f32 %v330, %v373
        %375 = vmatmul.f32.gmra.mxu0 %v321
        %v376 = vpop.f32.mrf.mxu0
        %v377 = vadd.f32 %v330, %v376
        %378 = vmatmul.f32.gmra.mxu0 %v322
        %v379 = vpop.f32.mrf.mxu0
        %v380 = vadd.f32 %v330, %v379
        %381 = vmatmul.f32.gmra.mxu0 %v323
        %v382 = vpop.f32.mrf.mxu0
        %v383 = vadd.f32 %v330, %v382
        %384 = vmatmul.f32.gmra.mxu0 %v324
        %v385 = vpop.f32.mrf.mxu0
        %v386 = vadd.f32 %v330, %v385
        %387 = vmatmul.f32.gmra.mxu0 %v325
        %v388 = vpop.f32.mrf.mxu0
        %v389 = vadd.f32 %v330, %v388
        %390 = vmatmul.f32.gmra.mxu0 %v326
        %v391 = vpop.f32.mrf.mxu0
        %v392 = vadd.f32 %v330, %v391
        %393 = vmatmul.f32.gmra.mxu0 %v327
        %v394 = vpop.f32.mrf.mxu0
        %v395 = vadd.f32 %v330, %v394
        %396 = vdwg.mxu0
        %v397 = vmul.f32 %v350, 0.5
        %v398 = vmul.f32 %v353, 0.5
        %v399 = vmul.f32 %v356, 0.5
        %v400 = vmul.f32 %v359, 0.5
        %v401 = vmul.f32 %v362, 0.5
        %v402 = vmul.f32 %v365, 0.5
        %v403 = vmul.f32 %v368, 0.5
        %v404 = vmul.f32 %v371, 0.5
        %v405 = vmul.f32 %v374, 0.5
        %v406 = vmul.f32 %v377, 0.5
        %v407 = vmul.f32 %v380, 0.5
        %v408 = vmul.f32 %v383, 0.5
        %v409 = vmul.f32 %v386, 0.5
        %v410 = vmul.f32 %v389, 0.5
        %v411 = vmul.f32 %v392, 0.5
        %v412 = vmul.f32 %v395, 0.5
        %v413 = vtanh.pop %v397
        %v414 = vtanh.pop %v398
        %v415 = vtanh.pop %v399
        %v416 = vtanh.pop %v400
        %v417 = vtanh.pop %v401
        %v418 = vtanh.pop %v402
        %v419 = vtanh.pop %v403
        %v420 = vtanh.pop %v404
        %v421 = vtanh.pop %v405
        %v422 = vtanh.pop %v406
        %v423 = vtanh.pop %v407
        %v424 = vtanh.pop %v408
        %v425 = vtanh.pop %v409
        %v426 = vtanh.pop %v410
        %v427 = vtanh.pop %v411
        %v428 = vtanh.pop %v412
        %v429 = vmul.f32 %v413, 0.5
        %v430 = vmul.f32 %v414, 0.5
        %v431 = vmul.f32 %v415, 0.5
        %v432 = vmul.f32 %v416, 0.5
        %v433 = vmul.f32 %v417, 0.5
        %v434 = vmul.f32 %v418, 0.5
        %v435 = vmul.f32 %v419, 0.5
        %v436 = vmul.f32 %v420, 0.5
        %v437 = vmul.f32 %v421, 0.5
        %v438 = vmul.f32 %v422, 0.5
        %v439 = vmul.f32 %v423, 0.5
        %v440 = vmul.f32 %v424, 0.5
        %v441 = vmul.f32 %v425, 0.5
        %v442 = vmul.f32 %v426, 0.5
        %v443 = vmul.f32 %v427, 0.5
        %v444 = vmul.f32 %v428, 0.5
        %v445 = vadd.f32 %v429, 0.5
        %v446 = vadd.f32 %v430, 0.5
        %v447 = vadd.f32 %v431, 0.5
        %v448 = vadd.f32 %v432, 0.5
        %v449 = vadd.f32 %v433, 0.5
        %v450 = vadd.f32 %v434, 0.5
        %v451 = vadd.f32 %v435, 0.5
        %v452 = vadd.f32 %v436, 0.5
        %v453 = vadd.f32 %v437, 0.5
        %v454 = vadd.f32 %v438, 0.5
        %v455 = vadd.f32 %v439, 0.5
        %v456 = vadd.f32 %v440, 0.5
        %v457 = vadd.f32 %v441, 0.5
        %v458 = vadd.f32 %v442, 0.5
        %v459 = vadd.f32 %v443, 0.5
        %v460 = vadd.f32 %v444, 0.5
        %v461 = vld [vmem:[%s4] sm:$0x1]
        %v463 = vperm.slane %v461, 0
        %465 = vmatpush.msra.mxu0 %v311
        %466 = vmatpush.msra.mxu0 %v310
        %467 = vmatpush.msra.mxu0 %v309
        %468 = vmatpush.msra.mxu0 %v308
        %469 = vmatpush.msra.mxu0 %v307
        %470 = vmatpush.msra.mxu0 %v306
        %471 = vmatpush.msra.mxu0 %v305
        %472 = vmatpush.msra.mxu0 %v304
        %473 = vmatpush.msra.mxu0 %v303
        %474 = vmatpush.msra.mxu0 %v302
        %475 = vmatpush.msra.mxu0 %v301
        %476 = vmatpush.msra.mxu0 %v300
        %477 = vmatpush.msra.mxu0 %v299
        %478 = vmatpush.msra.mxu0 %v298
        %479 = vmatpush.msra.mxu0 %v297
        %480 = vmatpush.msra.mxu0 %v296
        %481 = vmatmul.f32.gmra.mxu0 %v445
        %v482 = vpop.f32.mrf.mxu0
        %v483 = vadd.f32 %v463, %v482
        %484 = vmatmul.f32.gmra.mxu0 %v446
        %v485 = vpop.f32.mrf.mxu0
        %v486 = vadd.f32 %v463, %v485
        %487 = vmatmul.f32.gmra.mxu0 %v447
        %v488 = vpop.f32.mrf.mxu0
        %v489 = vadd.f32 %v463, %v488
        %490 = vmatmul.f32.gmra.mxu0 %v448
        %v491 = vpop.f32.mrf.mxu0
        %v492 = vadd.f32 %v463, %v491
        %493 = vmatmul.f32.gmra.mxu0 %v449
        %v494 = vpop.f32.mrf.mxu0
        %v495 = vadd.f32 %v463, %v494
        %496 = vmatmul.f32.gmra.mxu0 %v450
        %v497 = vpop.f32.mrf.mxu0
        %v498 = vadd.f32 %v463, %v497
        %499 = vmatmul.f32.gmra.mxu0 %v451
        %v500 = vpop.f32.mrf.mxu0
        %v501 = vadd.f32 %v463, %v500
        %502 = vmatmul.f32.gmra.mxu0 %v452
        %v503 = vpop.f32.mrf.mxu0
        %v504 = vadd.f32 %v463, %v503
        %505 = vmatmul.f32.gmra.mxu0 %v453
        %v506 = vpop.f32.mrf.mxu0
        %v507 = vadd.f32 %v463, %v506
        %508 = vmatmul.f32.gmra.mxu0 %v454
        %v509 = vpop.f32.mrf.mxu0
        %v510 = vadd.f32 %v463, %v509
        %511 = vmatmul.f32.gmra.mxu0 %v455
        %v512 = vpop.f32.mrf.mxu0
        %v513 = vadd.f32 %v463, %v512
        %514 = vmatmul.f32.gmra.mxu0 %v456
        %v515 = vpop.f32.mrf.mxu0
        %v516 = vadd.f32 %v463, %v515
        %517 = vmatmul.f32.gmra.mxu0 %v457
        %v518 = vpop.f32.mrf.mxu0
        %v519 = vadd.f32 %v463, %v518
        %520 = vmatmul.f32.gmra.mxu0 %v458
        %v521 = vpop.f32.mrf.mxu0
        %v522 = vadd.f32 %v463, %v521
        %523 = vmatmul.f32.gmra.mxu0 %v459
        %v524 = vpop.f32.mrf.mxu0
        %v525 = vadd.f32 %v463, %v524
        %526 = vmatmul.f32.gmra.mxu0 %v460
        %v527 = vpop.f32.mrf.mxu0
        %v528 = vadd.f32 %v463, %v527
        %529 = vdwg.mxu0
        %v530 = vmul.f32 %v483, 0.5
        %v531 = vmul.f32 %v486, 0.5
        %v532 = vmul.f32 %v489, 0.5
        %v533 = vmul.f32 %v492, 0.5
        %v534 = vmul.f32 %v495, 0.5
        %v535 = vmul.f32 %v498, 0.5
        %v536 = vmul.f32 %v501, 0.5
        %v537 = vmul.f32 %v504, 0.5
        %v538 = vmul.f32 %v507, 0.5
        %v539 = vmul.f32 %v510, 0.5
        %v540 = vmul.f32 %v513, 0.5
        %v541 = vmul.f32 %v516, 0.5
        %v542 = vmul.f32 %v519, 0.5
        %v543 = vmul.f32 %v522, 0.5
        %v544 = vmul.f32 %v525, 0.5
        %v545 = vmul.f32 %v528, 0.5
        %v546 = vtanh.pop %v530
        %v547 = vtanh.pop %v531
        %v548 = vtanh.pop %v532
        %v549 = vtanh.pop %v533
        %v550 = vtanh.pop %v534
        %v551 = vtanh.pop %v535
        %v552 = vtanh.pop %v536
        %v553 = vtanh.pop %v537
        %v554 = vtanh.pop %v538
        %v555 = vtanh.pop %v539
        %v556 = vtanh.pop %v540
        %v557 = vtanh.pop %v541
        %v558 = vtanh.pop %v542
        %v559 = vtanh.pop %v543
        %v560 = vtanh.pop %v544
        %v561 = vtanh.pop %v545
        %v562 = vmul.f32 %v546, 0.5
        %v563 = vmul.f32 %v547, 0.5
        %v564 = vmul.f32 %v548, 0.5
        %v565 = vmul.f32 %v549, 0.5
        %v566 = vmul.f32 %v550, 0.5
        %v567 = vmul.f32 %v551, 0.5
        %v568 = vmul.f32 %v552, 0.5
        %v569 = vmul.f32 %v553, 0.5
        %v570 = vmul.f32 %v554, 0.5
        %v571 = vmul.f32 %v555, 0.5
        %v572 = vmul.f32 %v556, 0.5
        %v573 = vmul.f32 %v557, 0.5
        %v574 = vmul.f32 %v558, 0.5
        %v575 = vmul.f32 %v559, 0.5
        %v576 = vmul.f32 %v560, 0.5
        %v577 = vmul.f32 %v561, 0.5
        %v578 = vadd.f32 %v562, 0.5
        %v579 = vadd.f32 %v563, 0.5
        %v580 = vadd.f32 %v564, 0.5
        %v581 = vadd.f32 %v565, 0.5
        %v582 = vadd.f32 %v566, 0.5
        %v583 = vadd.f32 %v567, 0.5
        %v584 = vadd.f32 %v568, 0.5
        %v585 = vadd.f32 %v569, 0.5
        %v586 = vadd.f32 %v570, 0.5
        %v587 = vadd.f32 %v571, 0.5
        %v588 = vadd.f32 %v572, 0.5
        %v589 = vadd.f32 %v573, 0.5
        %v590 = vadd.f32 %v574, 0.5
        %v591 = vadd.f32 %v575, 0.5
        %v592 = vadd.f32 %v576, 0.5
        %v593 = vadd.f32 %v577, 0.5
        %594 = vst [vmem:[%s277] sm:$0xff] %v578
        %595 = vst [vmem:[%s277 + $0x8] sm:$0xff] %v579
        %596 = vst [vmem:[%s277 + $0x10] sm:$0xff] %v580
        %597 = vst [vmem:[%s277 + $0x18] sm:$0xff] %v581
        %598 = vst [vmem:[%s277 + $0x20] sm:$0xff] %v582
        %599 = vst [vmem:[%s277 + $0x28] sm:$0xff] %v583
        %600 = vst [vmem:[%s277 + $0x30] sm:$0xff] %v584
        %601 = vst [vmem:[%s277 + $0x38] sm:$0xff] %v585
        %602 = vst [vmem:[%s277 + $0x40] sm:$0xff] %v586
        %603 = vst [vmem:[%s277 + $0x48] sm:$0xff] %v587
        %604 = vst [vmem:[%s277 + $0x50] sm:$0xff] %v588
        %605 = vst [vmem:[%s277 + $0x58] sm:$0xff] %v589
        %606 = vst [vmem:[%s277 + $0x60] sm:$0xff] %v590
        %607 = vst [vmem:[%s277 + $0x68] sm:$0xff] %v591
        %608 = vst [vmem:[%s277 + $0x70] sm:$0xff] %v592
        %609 = vst [vmem:[%s277 + $0x78] sm:$0xff] %v593
        %s610 = sand.u32 %s141, 1
        %s611 = scalar_lea.sflag [#allocation4], %s610
        %s612 = sand.u32 %s141, 1
        %s613 = smul.addr %s612, 128
        %s614 = scalar_lea.vmem [#allocation8], %s613
        // Predicated region
        $region53: #{tpu_custom_call.1} parent=39 // pred_check
          %p615 = pneg %p151
        $region54: #{tpu_custom_call.1} parent=39 // pred_check_branch
          %617 = sbr.rel (%p615) target = $region56
        $region55: #{tpu_custom_call.1} parent=39 // pred_region
          %s618 = smul.u32 16, %s23
          %620 = vsyncadd %s611, 0
          %s621 = smul.addr %s618, 8
          %s622 = scalar_lea.hbm %s5, %s621
          %s623 = sshll.u32 %s614, 4
          %s624 = int_to_ptr.vmem [resolvable:$true] %s623
          %s625 = sshll.u32 %s622, 4
          %s626 = int_to_ptr.hbm [resolvable:$true] %s625
          %631 = dma.vmem_to_hbm [thread:$0]  %s624, 2048, %s626, %s611, 128, 128, 8
        $region56: #{tpu_custom_call.1} parent=39 // pred_fallthru
          _
      $region40: #{tpu_custom_call.1} parent=5 // pred_fallthru
        _
      %p632 = scmp.le.s32.totalorder 2, %s18
      // Predicated region
      $region57: #{tpu_custom_call.1} parent=5 // pred_check
        %p633 = pneg %p632
      $region58: #{tpu_custom_call.1} parent=5 // pred_check_branch
        %635 = sbr.rel (%p633) target = $region60
      $region59: #{tpu_custom_call.1} parent=5 // pred_region
        %s636 = ssub.s32 %s18, 2
        // Predicated region
        $region61: #{tpu_custom_call.1} parent=59 // pred_check
          %p637 = pneg %p157
        $region62: #{tpu_custom_call.1} parent=59 // pred_check_branch
          %639 = sbr.rel (%p637) target = $region64
        $region63: #{tpu_custom_call.1} parent=59 // pred_region
          %s640 = sand.u32 %s142, 1
          %s641 = scalar_lea.sflag [#allocation4], %s640
          %s642 = sand.u32 %s142, 1
          %s643 = smul.addr %s642, 128
          %s644 = scalar_lea.vmem [#allocation8], %s643
          %646 = dma.done %s641, 2048
        $region64: #{tpu_custom_call.1} parent=59 // pred_fallthru
          _
      $region60: #{tpu_custom_call.1} parent=5 // pred_fallthru
        _
    $region6: #{tpu_custom_call.1} parent=1 // loop_footer
      %s22 = sadd.s32 1, %s18
    $region7: #{tpu_custom_call.1} parent=1 // loop_footer_branch
      %17 = sbr.rel target = $region3
    $region8: #{tpu_custom_call.1} parent=1 // loop_exit
      _
    %647 = vsyncpa [#allocation3], 1
    %s648 = scalar_lea.sflag [#allocation3], 1
    %649 = vsyncpa %s648, 1
    %650 = vsyncpa [#allocation6], 1
    %651 = vsyncpa [#allocation4], 1
    %s652 = scalar_lea.sflag [#allocation4], 1
    %653 = vsyncpa %s652, 1

</llo_original>
